<compile_context>
chip_gen: v7x
topology: tpu7x:2x2x1
jax: 0.10.0
libtpu: 0.0.40
codegen_flags: <defaults>
</compile_context>

<pallas_src>
import functools
import math

import numpy as np
import jax
import jax.numpy as jnp
from jax import lax
from jax.experimental import pallas as pl
from jax.experimental.pallas import tpu as pltpu

SEQ_LEN = 128          # small stand-in for the reference SEQ_LEN=2880 embedding table
EMBED_DIM = 64
NUM_HEADS = 1
HEAD_DIM = EMBED_DIM // NUM_HEADS
BLOCK_SIZE = 64        # hard-coded in apply_sparse_attention
TOP_K = 8


# ----------------------------------------------------------------------------
# Host-side sparse-mask construction (deterministic, depends only on phi & S).
# Returns an ADDITIVE mask: 0.0 where attention is kept, -inf where masked,
# so the kernel applies it with a single add (x + 0 = x, x + -inf = -inf).
# ----------------------------------------------------------------------------
def build_additive_mask(phi_np: np.ndarray, seq_len: int) -> np.ndarray:
    """coarse (block-diagonal) & fine (per-block top-k rows selected by phi)."""
    dh = phi_np.shape[2]
    coarse = np.zeros((seq_len, seq_len), dtype=bool)
    fine = np.zeros((seq_len, seq_len), dtype=bool)
    num_blocks = (seq_len + BLOCK_SIZE - 1) // BLOCK_SIZE
    for i in range(num_blocks):
        start = i * BLOCK_SIZE
        end = min((i + 1) * BLOCK_SIZE, seq_len)
        bs = end - start
        coarse[start:end, start:end] = True
        w = min(bs, dh)                        # phi[:, :, :end-start] clips at head_dim
        qb = phi_np[0, :, :w]                  # (H, w)
        sim = qb.T @ qb                        # (w, w): outer similarity of phi slots
        k = min(TOP_K, bs, w)
        idx = np.argsort(-sim, axis=0)[:k, :]  # top-k rows per column (torch.topk dim=0)
        for p in np.unique(idx.ravel()):
            if p < bs:
                fine[start + p, :] = True      # reference: fine_mask[start + idx] = True
    combined = coarse & fine
    return np.where(combined, np.float32(0.0), np.float32(-np.inf)).astype(np.float32)


# ----------------------------------------------------------------------------
# Pallas kernel: one batch element per grid step (batch dim squeezed away).
# ----------------------------------------------------------------------------
def _nsa_kernel(x_ref, posphi_ref, maskadd_ref, o_ref, *, q_scale, matmul_dtype):
    x = x_ref[...]                                      # (S, E)
    # q = (x + pos_emb + phi) * head_dim**-0.25 ; posphi_ref is pre-scaled on
    # the host, so the sqrt(head_dim) normalization costs one SxE multiply and
    # the SxS scores need no further scaling.
    q = x * q_scale + posphi_ref[...]                   # (S, E)
    qm = q.astype(matmul_dtype)
    # scores[i, j] = <q_i, q_j> / sqrt(head_dim)  — native NT MXU contraction.
    scores = lax.dot_general(qm, qm, (((1,), (1,)), ((), ())),
                             preferred_element_type=jnp.float32)  # (S, S)
    # row-wise softmax (torch.softmax(dim=-1)); denominator via EUP reciprocal.
    m = jnp.max(scores, axis=-1, keepdims=True)
    e = jnp.exp(scores - m)
    inv = pl.reciprocal(jnp.sum(e, axis=-1, keepdims=True), approx=True)
    # apply sparse pattern post-softmax, additively: +0 keeps, + -inf masks
    # (identical to attn_probs[~combined_mask] = -inf in the reference).
    probs = e * inv + maskadd_ref[...]
    # out = probs @ x   (values == x, as in the reference's final bmm with x)
    o_ref[...] = lax.dot_general(
        probs.astype(matmul_dtype), x.astype(matmul_dtype),
        (((1,), (0,)), ((), ())),
        preferred_element_type=jnp.float32)


def nsparse_attention(x, phi, pos_table, mask_add, *, matmul_dtype=jnp.float32):
    """matmul_dtype=jnp.bfloat16 enables the fast MXU path on v6e/v7x (minor
    numeric deviation); default f32 keeps parity with the torch reference."""
    B, S, E = x.shape
    q_scale = float(HEAD_DIM) ** -0.25
    # Glue: fold position embedding + phi broadcast + scale into one (S, E) addend.
    posphi = (pos_table[:S] + phi.reshape(1, E)) * q_scale
    kernel = functools.partial(_nsa_kernel, q_scale=q_scale, matmul_dtype=matmul_dtype)
    return pl.pallas_call(
        kernel,
        out_shape=jax.ShapeDtypeStruct((B, S, E), jnp.float32),
        grid=(B,),
        in_specs=[
            # x: per-batch (S, E) tile, batch dim squeezed out of the kernel Ref
            pl.BlockSpec((pl.Squeezed(), S, E), lambda b: (b, 0, 0)),
            # pos+phi (pre-scaled) and additive mask: constant index_map, so the
            # pipeline fetches them once and keeps them resident across batches.
            pl.BlockSpec((S, E), lambda b: (0, 0)),
            pl.BlockSpec((S, S), lambda b: (0, 0)),
        ],
        out_specs=pl.BlockSpec((pl.Squeezed(), S, E), lambda b: (b, 0, 0)),
        compiler_params=pltpu.CompilerParams(
            # batch axis is independent work -> shards across TensorCores (v7x).
            dimension_semantics=("parallel",)),
    )(x, posphi, mask_add)


if __name__ == "__main__":
    key = jax.random.PRNGKey(0)
    k_phi, k_pos, k_x = jax.random.split(key, 3)

    # Parameters (deterministic, matching nn.Parameter(randn) / nn.Embedding init)
    phi = jax.random.normal(k_phi, (1, NUM_HEADS, HEAD_DIM), dtype=jnp.float32)
    pos_table = jax.random.normal(k_pos, (SEQ_LEN, EMBED_DIM), dtype=jnp.float32)

    # Example input
    B, S = 2, 128
    x = jax.random.normal(k_x, (B, S, EMBED_DIM), dtype=jnp.float32)

    # Host-side combined sparse mask, pre-baked as additive 0 / -inf.
    mask_add = jnp.asarray(build_additive_mask(np.asarray(phi), S), dtype=jnp.float32)

    out = nsparse_attention(x, phi, pos_table, mask_add)
    out = jax.block_until_ready(out)
    assert out.shape == (B, S, EMBED_DIM)
    print("KERNEL_OK")
</pallas_src>

<mosaic_0001>
module attributes {stable_mosaic.version = 11 : i64} {
  func.func @_nsa_kernel(%arg0: i32, %arg1: memref<1x128x64xf32, #tpu.memory_space<vmem>>, %arg2: memref<128x64xf32, #tpu.memory_space<vmem>>, %arg3: memref<128x128xf32, #tpu.memory_space<vmem>>, %arg4: memref<1x128x64xf32, #tpu.memory_space<vmem>>) attributes {dimension_semantics = [#tpu.dimension_semantics<parallel>], iteration_bounds = array<i64: 2>, scalar_prefetch = 0 : i64, scratch_operands = 0 : i64, tpu.core_type = #tpu.core_type<tc>, window_params = [{transform_indices = @transform_0, window_bounds = array<i64: 1, 128, 64>}, {pipeline_mode = #tpu.pipeline_mode<synchronous>, transform_indices = @transform_1, window_bounds = array<i64: 128, 64>}, {pipeline_mode = #tpu.pipeline_mode<synchronous>, transform_indices = @transform_2, window_bounds = array<i64: 128, 128>}, {transform_indices = @transform_3, window_bounds = array<i64: 1, 128, 64>}]} {
    %c0 = arith.constant 0 : index
    %c0_0 = arith.constant 0 : index
    %c0_1 = arith.constant 0 : index
    %0 = vector.load %arg1[%c0, %c0_0, %c0_1] : memref<1x128x64xf32, #tpu.memory_space<vmem>>, vector<1x128x64xf32>
    %1 = vector.shape_cast %0 : vector<1x128x64xf32> to vector<128x64xf32>
    %cst = arith.constant 0.353553385 : f32
    %2 = vector.broadcast %cst : f32 to vector<128x64xf32>
    %3 = arith.mulf %1, %2 : vector<128x64xf32>
    %c0_2 = arith.constant 0 : index
    %c0_3 = arith.constant 0 : index
    %4 = vector.load %arg2[%c0_2, %c0_3] : memref<128x64xf32, #tpu.memory_space<vmem>>, vector<128x64xf32>
    %5 = arith.addf %3, %4 : vector<128x64xf32>
    %cst_4 = arith.constant dense<0.000000e+00> : vector<128x128xf32>
    %6 = tpu.matmul %5, %5, %cst_4 {dimension_numbers = #tpu.dot_dimension_numbers<[1], [1], [0], [0], [0, 0, 1, 0], [], []>} : vector<128x64xf32>, vector<128x64xf32>, vector<128x128xf32> -> vector<128x128xf32>
    %cst_5 = arith.constant dense<0xFF800000> : vector<128xf32>
    %7 = vector.multi_reduction <maximumf>, %6, %cst_5 [1] : vector<128x128xf32> to vector<128xf32>
    %8 = vector.shape_cast %7 : vector<128xf32> to vector<128x1xf32>
    %9 = vector.broadcast %8 : vector<128x1xf32> to vector<128x128xf32>
    %10 = arith.subf %6, %9 : vector<128x128xf32>
    %11 = math.exp %10 : vector<128x128xf32>
    %cst_6 = arith.constant dense<0.000000e+00> : vector<128xf32>
    %12 = vector.multi_reduction <add>, %11, %cst_6 [1] : vector<128x128xf32> to vector<128xf32>
    %13 = vector.shape_cast %12 : vector<128xf32> to vector<128x1xf32>
    %14 = tpu.reciprocal %13 {approx = true} : vector<128x1xf32> -> vector<128x1xf32>
    %15 = vector.broadcast %14 : vector<128x1xf32> to vector<128x128xf32>
    %16 = arith.mulf %11, %15 : vector<128x128xf32>
    %c0_7 = arith.constant 0 : index
    %c0_8 = arith.constant 0 : index
    %17 = vector.load %arg3[%c0_7, %c0_8] : memref<128x128xf32, #tpu.memory_space<vmem>>, vector<128x128xf32>
    %18 = arith.addf %16, %17 : vector<128x128xf32>
    %cst_9 = arith.constant dense<0.000000e+00> : vector<128x64xf32>
    %19 = tpu.matmul %18, %1, %cst_9 {dimension_numbers = #tpu.dot_dimension_numbers<[1], [0], [0], [1], [0, 0, 1, 1], [], []>} : vector<128x128xf32>, vector<128x64xf32>, vector<128x64xf32> -> vector<128x64xf32>
    %c0_10 = arith.constant 0 : index
    %c0_11 = arith.constant 0 : index
    %c0_12 = arith.constant 0 : index
    %20 = vector.load %arg4[%c0_10, %c0_11, %c0_12] : memref<1x128x64xf32, #tpu.memory_space<vmem>>, vector<1x128x64xf32>
    %21 = vector.shape_cast %20 : vector<1x128x64xf32> to vector<128x64xf32>
    %22 = vector.shape_cast %19 : vector<128x64xf32> to vector<1x128x64xf32>
    tpu.vector_store %arg4[%c0_10, %c0_11, %c0_12], %22 {strides = array<i32>} : memref<1x128x64xf32, #tpu.memory_space<vmem>>, vector<1x128x64xf32>,
    return
  }
  func.func @transform_0(%arg0: i32) -> (i32, i32, i32) {
    %c0_i32 = arith.constant 0 : i32
    %c0_i32_0 = arith.constant 0 : i32
    %c0_i32_1 = arith.constant 0 : i32
    return %arg0, %c0_i32, %c0_i32_0 : i32, i32, i32
  }
  func.func @transform_1(%arg0: i32) -> (i32, i32) {
    %c0_i32 = arith.constant 0 : i32
    %c0_i32_0 = arith.constant 0 : i32
    %c0_i32_1 = arith.constant 0 : i32
    return %c0_i32, %c0_i32_0 : i32, i32
  }
  func.func @transform_2(%arg0: i32) -> (i32, i32) {
    %c0_i32 = arith.constant 0 : i32
    %c0_i32_0 = arith.constant 0 : i32
    %c0_i32_1 = arith.constant 0 : i32
    return %c0_i32, %c0_i32_0 : i32, i32
  }
  func.func @transform_3(%arg0: i32) -> (i32, i32, i32) {
    %c0_i32 = arith.constant 0 : i32
    %c0_i32_0 = arith.constant 0 : i32
    %c0_i32_1 = arith.constant 0 : i32
    return %arg0, %c0_i32, %c0_i32_0 : i32, i32, i32
  }
}

</mosaic_0001>

<llo_original>
// kernel: tpu_custom_call.1
$region0: #{tpu_custom_call.1}
  #allocation0 [shape = 'u32[]', space=smem, size = 0x4, offset = 0x4, fixed_abs, tag = 'smem constant byte address 0x4 - core index']
  #allocation1 [shape = 'u32[144,128]{1,0:T(1,128)}', space=vmem, size = 0x12000, scoped, tag = 'internal scratch']
  %s0 = inlined_call_operand.vmem [shape: f32[2,128,64], index: 0, kind: input, shape index: {}]
  %s1 = inlined_call_operand.vmem [shape: f32[128,64], index: 1, kind: input, shape index: {}]
  %s2 = inlined_call_operand.vmem [shape: f32[128,128], index: 2, kind: input, shape index: {}]
  %s3 = inlined_call_operand.vmem [shape: f32[2,128,64], index: 3, kind: output, shape index: {}]
  %s4 = sld [smem:[#allocation0]]
  $region45: #{tpu_custom_call.1} parent=0
    _
  %s6 = ssub.s32 1, %s4
  %s7 = scalar_select 0, %s6, %s4
  loop: start=0, step=1, limit=4
  $region2: #{tpu_custom_call.1} parent=0 // loop_pre_header
    _
  $region3: #{tpu_custom_call.1} parent=0 // loop_header
    %s9 = sphi 0, %s13
    %p10 = scmp.ge.s32.totalorder %s9, 4
    %s19 = sphi 0, %s21
    %s22 = sphi 0, %s19
    %s23 = sphi 0, %s22
    %s39 = sphi 0, %s23
    %s43 = sphi 0, %s43
    %s45 = sphi 0, %s43
    %s46 = sphi 0, %s45
    %s60 = sphi 0, %s46
    %s64 = sphi 0, %s64
    %s66 = sphi 0, %s64
    %s67 = sphi 0, %s66
    %s81 = sphi 0, %s67
    %s87 = sphi 0, %s89
    %s90 = sphi 0, %s87
    %s91 = sphi 0, %s90
    %s107 = sphi 0, %s91
  $region4: #{tpu_custom_call.1} parent=0 // loop_header_branch
    %12 = sbr.rel (%p10) target = $region8
  $region5: #{tpu_custom_call.1} parent=0 // loop_body
    %s14 = ssub.s32 %s9, 1
    %s15 = ssub.s32 %s9, 2
    %s16 = sadd.s32 %s9, 1
    %s17 = ssub.s32 %s9, %s16
    %p18 = scmp.eq.s32.totalorder %s17, 0
    %s20 = sadd.s32 %s19, 1
    %s21 = scalar_select %p18, %s19, %s20
    %p24 = pneg %p18
    %p25 = scmp.eq.s32.totalorder %s9, 1
    %p26 = por %p24, %p25
    %p27 = scmp.ne.s32.totalorder %s19, %s22
    %p28 = scmp.eq.s32.totalorder %s9, 0
    %p29 = por %p27, %p28
    %p30 = scmp.ne.s32.totalorder %s19, %s22
    %p31 = scmp.eq.s32.totalorder %s14, 1
    %p32 = por %p30, %p31
    %p33 = scmp.ne.s32.totalorder %s22, %s23
    %p34 = scmp.eq.s32.totalorder %s14, 0
    %p35 = por %p33, %p34
    %p36 = scmp.ne.s32.totalorder %s22, %s23
    %p37 = scmp.eq.s32.totalorder %s15, 1
    %p38 = por %p36, %p37
    %p40 = scmp.ne.s32.totalorder %s23, %s39
    %p41 = scmp.eq.s32.totalorder %s15, 0
    %p42 = por %p40, %p41
    %s44 = sadd.s32 %s43, 1
    %p47 = scmp.eq.s32.totalorder %s9, 1
    %p48 = scmp.ne.s32.totalorder %s43, %s45
    %p49 = scmp.eq.s32.totalorder %s9, 0
    %p50 = por %p48, %p49
    %p51 = scmp.ne.s32.totalorder %s43, %s45
    %p52 = scmp.eq.s32.totalorder %s14, 1
    %p53 = por %p51, %p52
    %p54 = scmp.ne.s32.totalorder %s45, %s46
    %p55 = scmp.eq.s32.totalorder %s14, 0
    %p56 = por %p54, %p55
    %p57 = scmp.ne.s32.totalorder %s45, %s46
    %p58 = scmp.eq.s32.totalorder %s15, 1
    %p59 = por %p57, %p58
    %p61 = scmp.ne.s32.totalorder %s46, %s60
    %p62 = scmp.eq.s32.totalorder %s15, 0
    %p63 = por %p61, %p62
    %s65 = sadd.s32 %s64, 1
    %p68 = scmp.eq.s32.totalorder %s9, 1
    %p69 = scmp.ne.s32.totalorder %s64, %s66
    %p70 = scmp.eq.s32.totalorder %s9, 0
    %p71 = por %p69, %p70
    %p72 = scmp.ne.s32.totalorder %s64, %s66
    %p73 = scmp.eq.s32.totalorder %s14, 1
    %p74 = por %p72, %p73
    %p75 = scmp.ne.s32.totalorder %s66, %s67
    %p76 = scmp.eq.s32.totalorder %s14, 0
    %p77 = por %p75, %p76
    %p78 = scmp.ne.s32.totalorder %s66, %s67
    %p79 = scmp.eq.s32.totalorder %s15, 1
    %p80 = por %p78, %p79
    %p82 = scmp.ne.s32.totalorder %s67, %s81
    %p83 = scmp.eq.s32.totalorder %s15, 0
    %p84 = por %p82, %p83
    %s85 = ssub.s32 %s9, %s16
    %p86 = scmp.eq.s32.totalorder %s85, 0
    %s88 = sadd.s32 %s87, 1
    %s89 = scalar_select %p86, %s87, %s88
    %p92 = pneg %p86
    %p93 = scmp.eq.s32.totalorder %s9, 1
    %p94 = por %p92, %p93
    %p95 = scmp.ne.s32.totalorder %s87, %s90
    %p96 = scmp.eq.s32.totalorder %s9, 0
    %p97 = por %p95, %p96
    %p98 = scmp.ne.s32.totalorder %s87, %s90
    %p99 = scmp.eq.s32.totalorder %s14, 1
    %p100 = por %p98, %p99
    %p101 = scmp.ne.s32.totalorder %s90, %s91
    %p102 = scmp.eq.s32.totalorder %s14, 0
    %p103 = por %p101, %p102
    %p104 = scmp.ne.s32.totalorder %s90, %s91
    %p105 = scmp.eq.s32.totalorder %s15, 1
    %p106 = por %p104, %p105
    %p108 = scmp.ne.s32.totalorder %s91, %s107
    %p109 = scmp.eq.s32.totalorder %s15, 0
    %p110 = por %p108, %p109
    %p111 = scmp.le.s32.totalorder 1, %s9
    %p112 = scmp.lt.s32.totalorder %s9, 3
    %p113 = pnand %p111, %p112
    %p114 = pneg %p113
    // Predicated region
    $region9: #{tpu_custom_call.1} parent=5 // pred_check
      _
    $region10: #{tpu_custom_call.1} parent=5 // pred_check_branch
      %116 = sbr.rel (%p113) target = $region12
    $region11: #{tpu_custom_call.1} parent=5 // pred_region
      %s117 = ssub.s32 %s9, 1
      // Predicated region
      $region13: #{tpu_custom_call.1} parent=11 // pred_check
        %p118 = pneg %p56
      $region14: #{tpu_custom_call.1} parent=11 // pred_check_branch
        %120 = sbr.rel (%p118) target = $region16
      $region15: #{tpu_custom_call.1} parent=11 // pred_region
        _
      $region16: #{tpu_custom_call.1} parent=11 // pred_fallthru
        _
      // Predicated region
      $region17: #{tpu_custom_call.1} parent=11 // pred_check
        %p121 = pneg %p77
      $region18: #{tpu_custom_call.1} parent=11 // pred_check_branch
        %123 = sbr.rel (%p121) target = $region20
      $region19: #{tpu_custom_call.1} parent=11 // pred_region
        _
      $region20: #{tpu_custom_call.1} parent=11 // pred_fallthru
        _
    $region12: #{tpu_custom_call.1} parent=5 // pred_fallthru
      _
    %p124 = scmp.lt.s32.totalorder %s9, 2
    // Predicated region
    $region21: #{tpu_custom_call.1} parent=5 // pred_check
      %p125 = pneg %p124
    $region22: #{tpu_custom_call.1} parent=5 // pred_check_branch
      %127 = sbr.rel (%p125) target = $region24
    $region23: #{tpu_custom_call.1} parent=5 // pred_region
      // Predicated region
      $region25: #{tpu_custom_call.1} parent=23 // pred_check
        %p128 = pneg %p29
      $region26: #{tpu_custom_call.1} parent=23 // pred_check_branch
        %130 = sbr.rel (%p128) target = $region28
      $region27: #{tpu_custom_call.1} parent=23 // pred_region
        %p131 = scmp.lt.s32.totalorder %s9, 1
        %s132 = scalar_select %p131, %s9, 1
        %s133 = smul.addr %s132, 16
        %s134 = smul.addr %s133, 8
        %s135 = scalar_lea.vmem %s0, %s134
      $region28: #{tpu_custom_call.1} parent=23 // pred_fallthru
        _
    $region24: #{tpu_custom_call.1} parent=5 // pred_fallthru
      _
    %p136 = scmp.le.s32.totalorder 1, %s9
    %p137 = scmp.lt.s32.totalorder %s9, 3
    %p138 = pnand %p136, %p137
    %p139 = pneg %p138
    // Predicated region
    $region29: #{tpu_custom_call.1} parent=5 // pred_check
      _
    $region30: #{tpu_custom_call.1} parent=5 // pred_check_branch
      %141 = sbr.rel (%p138) target = $region32
    $region31: #{tpu_custom_call.1} parent=5 // pred_region
      %s142 = ssub.s32 %s9, 1
      %p143 = scmp.lt.s32.totalorder %s14, 1
      %s144 = scalar_select %p143, %s14, 1
      %s145 = smul.addr %s144, 16
      %s146 = smul.addr %s145, 8
      %s147 = scalar_lea.vmem %s0, %s146
      %p148 = pneg %p35
      %p149 = pneg %p32
      %p150 = pneg %p56
      %p151 = pneg %p53
      %p152 = pneg %p77
      %p153 = pneg %p74
      %p154 = pneg %p103
      %p155 = pneg %p100
      %p156 = scmp.lt.s32.totalorder %s14, 1
      %s157 = scalar_select %p156, %s14, 1
      %s158 = smul.addr %s157, 16
      %s159 = smul.addr %s158, 8
      %s160 = scalar_lea.vmem %s3, %s159
      %p161 = scmp.lt.s32.totalorder %s14, 1
      %s162 = scalar_select %p161, %s14, 1
      %s163 = smul.addr %s162, 16
      %s164 = smul.addr %s163, 8
      %s165 = scalar_lea.vmem %s0, %s164
      %p166 = scmp.lt.s32.totalorder %s14, 1
      %s167 = scalar_select %p166, %s14, 1
      %s168 = smul.addr %s167, 16
      %s169 = smul.addr %s168, 8
      %s170 = scalar_lea.vmem %s3, %s169
      %v171 = vld [vmem:[%s165] sm:$0xff]
      %v172 = vld [vmem:[%s165 + $0x8] sm:$0xff]
      %v173 = vld [vmem:[%s165 + $0x10] sm:$0xff]
      %v174 = vld [vmem:[%s165 + $0x18] sm:$0xff]
      %v175 = vld [vmem:[%s165 + $0x20] sm:$0xff]
      %v176 = vld [vmem:[%s165 + $0x28] sm:$0xff]
      %v177 = vld [vmem:[%s165 + $0x30] sm:$0xff]
      %v178 = vld [vmem:[%s165 + $0x38] sm:$0xff]
      %v179 = vld [vmem:[%s165 + $0x40] sm:$0xff]
      %v180 = vld [vmem:[%s165 + $0x48] sm:$0xff]
      %v181 = vld [vmem:[%s165 + $0x50] sm:$0xff]
      %v182 = vld [vmem:[%s165 + $0x58] sm:$0xff]
      %v183 = vld [vmem:[%s165 + $0x60] sm:$0xff]
      %v184 = vld [vmem:[%s165 + $0x68] sm:$0xff]
      %v185 = vld [vmem:[%s165 + $0x70] sm:$0xff]
      %v186 = vld [vmem:[%s165 + $0x78] sm:$0xff]
      %v187 = vmul.f32 %v171, 0.35355338
      %v188 = vmul.f32 %v172, 0.35355338
      %v189 = vmul.f32 %v173, 0.35355338
      %v190 = vmul.f32 %v174, 0.35355338
      %v191 = vmul.f32 %v175, 0.35355338
      %v192 = vmul.f32 %v176, 0.35355338
      %v193 = vmul.f32 %v177, 0.35355338
      %v194 = vmul.f32 %v178, 0.35355338
      %v195 = vmul.f32 %v179, 0.35355338
      %v196 = vmul.f32 %v180, 0.35355338
      %v197 = vmul.f32 %v181, 0.35355338
      %v198 = vmul.f32 %v182, 0.35355338
      %v199 = vmul.f32 %v183, 0.35355338
      %v200 = vmul.f32 %v184, 0.35355338
      %v201 = vmul.f32 %v185, 0.35355338
      %v202 = vmul.f32 %v186, 0.35355338
      %v203 = vld [vmem:[%s1] sm:$0xff]
      %v204 = vld [vmem:[%s1 + $0x8] sm:$0xff]
      %v205 = vld [vmem:[%s1 + $0x10] sm:$0xff]
      %v206 = vld [vmem:[%s1 + $0x18] sm:$0xff]
      %v207 = vld [vmem:[%s1 + $0x20] sm:$0xff]
      %v208 = vld [vmem:[%s1 + $0x28] sm:$0xff]
      %v209 = vld [vmem:[%s1 + $0x30] sm:$0xff]
      %v210 = vld [vmem:[%s1 + $0x38] sm:$0xff]
      %v211 = vld [vmem:[%s1 + $0x40] sm:$0xff]
      %v212 = vld [vmem:[%s1 + $0x48] sm:$0xff]
      %v213 = vld [vmem:[%s1 + $0x50] sm:$0xff]
      %v214 = vld [vmem:[%s1 + $0x58] sm:$0xff]
      %v215 = vld [vmem:[%s1 + $0x60] sm:$0xff]
      %v216 = vld [vmem:[%s1 + $0x68] sm:$0xff]
      %v217 = vld [vmem:[%s1 + $0x70] sm:$0xff]
      %v218 = vld [vmem:[%s1 + $0x78] sm:$0xff]
      %v219 = vadd.f32 %v187, %v203
      %v220 = vadd.f32 %v188, %v204
      %v221 = vadd.f32 %v189, %v205
      %v222 = vadd.f32 %v190, %v206
      %v223 = vadd.f32 %v191, %v207
      %v224 = vadd.f32 %v192, %v208
      %v225 = vadd.f32 %v193, %v209
      %v226 = vadd.f32 %v194, %v210
      %v227 = vadd.f32 %v195, %v211
      %v228 = vadd.f32 %v196, %v212
      %v229 = vadd.f32 %v197, %v213
      %v230 = vadd.f32 %v198, %v214
      %v231 = vadd.f32 %v199, %v215
      %v232 = vadd.f32 %v200, %v216
      %v233 = vadd.f32 %v201, %v217
      %v234 = vadd.f32 %v202, %v218
      %vm235 = vcmask 523264
      %v237 = vsel %vm235, %v219, 0
      %v240 = vsel %vm235, %v220, 0
      %v243 = vsel %vm235, %v221, 0
      %v246 = vsel %vm235, %v222, 0
      %v249 = vsel %vm235, %v223, 0
      %v252 = vsel %vm235, %v224, 0
      %v255 = vsel %vm235, %v225, 0
      %v258 = vsel %vm235, %v226, 0
      %v261 = vsel %vm235, %v227, 0
      %v264 = vsel %vm235, %v228, 0
      %v267 = vsel %vm235, %v229, 0
      %v270 = vsel %vm235, %v230, 0
      %v273 = vsel %vm235, %v231, 0
      %v276 = vsel %vm235, %v232, 0
      %v279 = vsel %vm235, %v233, 0
      %v282 = vsel %vm235, %v234, 0
      %284 = vmatprep.subr.mxu0 0.0
      %285 = vmatpush1.xpose.msra.mxu0 %v237
      %286 = vmatprep.subr.mxu0 0.0
      %287 = vmatpush1.xpose.msra.mxu0 %v240
      %288 = vmatprep.subr.mxu0 0.0
      %289 = vmatpush1.xpose.msra.mxu0 %v243
      %290 = vmatprep.subr.mxu0 0.0
      %291 = vmatpush1.xpose.msra.mxu0 %v246
      %292 = vmatprep.subr.mxu0 0.0
      %293 = vmatpush1.xpose.msra.mxu0 %v249
      %294 = vmatprep.subr.mxu0 0.0
      %295 = vmatpush1.xpose.msra.mxu0 %v252
      %296 = vmatprep.subr.mxu0 0.0
      %297 = vmatpush1.xpose.msra.mxu0 %v255
      %298 = vmatprep.subr.mxu0 0.0
      %299 = vmatpush1.xpose.msra.mxu0 %v258
      %300 = vmatprep.subr.mxu0 0.0
      %301 = vmatpush1.xpose.msra.mxu0 %v261
      %302 = vmatprep.subr.mxu0 0.0
      %303 = vmatpush1.xpose.msra.mxu0 %v264
      %304 = vmatprep.subr.mxu0 0.0
      %305 = vmatpush1.xpose.msra.mxu0 %v267
      %306 = vmatprep.subr.mxu0 0.0
      %307 = vmatpush1.xpose.msra.mxu0 %v270
      %308 = vmatprep.subr.mxu0 0.0
      %309 = vmatpush1.xpose.msra.mxu0 %v273
      %310 = vmatprep.subr.mxu0 0.0
      %311 = vmatpush1.xpose.msra.mxu0 %v276
      %312 = vmatprep.subr.mxu0 0.0
      %313 = vmatpush1.xpose.msra.mxu0 %v279
      %314 = vmatprep.subr.mxu0 0.0
      %315 = vmatpush1.xpose.msra.mxu0 %v282
      %316 = vmatprep.subr.mxu0 0.0
      %317 = vmatpush1.xpose.msra.mxu0 0.0
      %318 = vmatprep.subr.mxu0 0.0
      %319 = vmatpush1.xpose.msra.mxu0 0.0
      %320 = vmatprep.subr.mxu0 0.0
      %321 = vmatpush1.xpose.msra.mxu0 0.0
      %322 = vmatprep.subr.mxu0 0.0
      %323 = vmatpush1.xpose.msra.mxu0 0.0
      %324 = vmatprep.subr.mxu0 0.0
      %325 = vmatpush1.xpose.msra.mxu0 0.0
      %326 = vmatprep.subr.mxu0 0.0
      %327 = vmatpush1.xpose.msra.mxu0 0.0
      %328 = vmatprep.subr.mxu0 0.0
      %329 = vmatpush1.xpose.msra.mxu0 0.0
      %330 = vmatprep.subr.mxu0 0.0
      %331 = vmatpush1.xpose.msra.mxu0 0.0
      %332 = vmatprep.subr.mxu0 0.0
      %333 = vmatpush1.xpose.msra.mxu0 0.0
      %334 = vmatprep.subr.mxu0 0.0
      %335 = vmatpush1.xpose.msra.mxu0 0.0
      %336 = vmatprep.subr.mxu0 0.0
      %337 = vmatpush1.xpose.msra.mxu0 0.0
      %338 = vmatprep.subr.mxu0 0.0
      %339 = vmatpush1.xpose.msra.mxu0 0.0
      %340 = vmatprep.subr.mxu0 0.0
      %341 = vmatpush1.xpose.msra.mxu0 0.0
      %342 = vmatprep.subr.mxu0 0.0
      %343 = vmatpush1.xpose.msra.mxu0 0.0
      %344 = vmatprep.subr.mxu0 0.0
      %345 = vmatpush1.xpose.msra.mxu0 0.0
      %346 = vmatprep.subr.mxu0 0.0
      %347 = vmatpush1.xpose.msra.mxu0 0.0
      %348 = vmatprep.mubr.f32.mxu0 0.0
      %349 = vmatmul.mubr.f32.gmra.mrb[0].mxu0 %v237
      %v350 = vpop.f32.mrb[0].mxu0
      %v351 = vadd.f32 0.0, %v350
      %v352 = vpop.f32.mrb[0].mxu0
      %353 = vmatprep.mubr.f32.mxu0 0.0
      %354 = vmatmul.mubr.f32.gmra.mrb[0].mxu0 %v240
      %v355 = vpop.f32.mrb[0].mxu0
      %v356 = vadd.f32 0.0, %v355
      %v357 = vpop.f32.mrb[0].mxu0
      %358 = vmatprep.mubr.f32.mxu0 0.0
      %359 = vmatmul.mubr.f32.gmra.mrb[0].mxu0 %v243
      %v360 = vpop.f32.mrb[0].mxu0
      %v361 = vadd.f32 0.0, %v360
      %v362 = vpop.f32.mrb[0].mxu0
      %363 = vmatprep.mubr.f32.mxu0 0.0
      %364 = vmatmul.mubr.f32.gmra.mrb[0].mxu0 %v246
      %v365 = vpop.f32.mrb[0].mxu0
      %v366 = vadd.f32 0.0, %v365
      %v367 = vpop.f32.mrb[0].mxu0
      %368 = vmatprep.mubr.f32.mxu0 0.0
      %369 = vmatmul.mubr.f32.gmra.mrb[0].mxu0 %v249
      %v370 = vpop.f32.mrb[0].mxu0
      %v371 = vadd.f32 0.0, %v370
      %v372 = vpop.f32.mrb[0].mxu0
      %373 = vmatprep.mubr.f32.mxu0 0.0
      %374 = vmatmul.mubr.f32.gmra.mrb[0].mxu0 %v252
      %v375 = vpop.f32.mrb[0].mxu0
      %v376 = vadd.f32 0.0, %v375
      %v377 = vpop.f32.mrb[0].mxu0
      %378 = vmatprep.mubr.f32.mxu0 0.0
      %379 = vmatmul.mubr.f32.gmra.mrb[0].mxu0 %v255
      %v380 = vpop.f32.mrb[0].mxu0
      %v381 = vadd.f32 0.0, %v380
      %v382 = vpop.f32.mrb[0].mxu0
      %383 = vmatprep.mubr.f32.mxu0 0.0
      %384 = vmatmul.mubr.f32.gmra.mrb[0].mxu0 %v258
      %v385 = vpop.f32.mrb[0].mxu0
      %v386 = vadd.f32 0.0, %v385
      %v387 = vpop.f32.mrb[0].mxu0
      %388 = vmatprep.mubr.f32.mxu0 0.0
      %389 = vmatmul.mubr.f32.gmra.mrb[0].mxu0 %v261
      %v390 = vpop.f32.mrb[0].mxu0
      %v391 = vadd.f32 0.0, %v390
      %v392 = vpop.f32.mrb[0].mxu0
      %393 = vmatprep.mubr.f32.mxu0 0.0
      %394 = vmatmul.mubr.f32.gmra.mrb[0].mxu0 %v264
      %v395 = vpop.f32.mrb[0].mxu0
      %v396 = vadd.f32 0.0, %v395
      %v397 = vpop.f32.mrb[0].mxu0
      %398 = vmatprep.mubr.f32.mxu0 0.0
      %399 = vmatmul.mubr.f32.gmra.mrb[0].mxu0 %v267
      %v400 = vpop.f32.mrb[0].mxu0
      %v401 = vadd.f32 0.0, %v400
      %v402 = vpop.f32.mrb[0].mxu0
      %403 = vmatprep.mubr.f32.mxu0 0.0
      %404 = vmatmul.mubr.f32.gmra.mrb[0].mxu0 %v270
      %v405 = vpop.f32.mrb[0].mxu0
      %v406 = vadd.f32 0.0, %v405
      %v407 = vpop.f32.mrb[0].mxu0
      %408 = vmatprep.mubr.f32.mxu0 0.0
      %409 = vmatmul.mubr.f32.gmra.mrb[0].mxu0 %v273
      %v410 = vpop.f32.mrb[0].mxu0
      %v411 = vadd.f32 0.0, %v410
      %v412 = vpop.f32.mrb[0].mxu0
      %413 = vmatprep.mubr.f32.mxu0 0.0
      %414 = vmatmul.mubr.f32.gmra.mrb[0].mxu0 %v276
      %v415 = vpop.f32.mrb[0].mxu0
      %v416 = vadd.f32 0.0, %v415
      %v417 = vpop.f32.mrb[0].mxu0
      %418 = vmatprep.mubr.f32.mxu0 0.0
      %419 = vmatmul.mubr.f32.gmra.mrb[0].mxu0 %v279
      %v420 = vpop.f32.mrb[0].mxu0
      %v421 = vadd.f32 0.0, %v420
      %v422 = vpop.f32.mrb[0].mxu0
      %423 = vmatprep.mubr.f32.mxu0 0.0
      %424 = vmatmul.mubr.f32.gmra.mrb[0].mxu0 %v282
      %v425 = vpop.f32.mrb[0].mxu0
      %v426 = vadd.f32 0.0, %v425
      %v427 = vpop.f32.mrb[0].mxu0
      %428 = vdwg.mxu0
      %429 = vmax.xlane.f32.xlu0 %v351
      %v430 = vpop.xlane.xlu0 %429
      %431 = vmax.xlane.f32.xlu0 %v356
      %v432 = vpop.xlane.xlu0 %431
      %433 = vmax.xlane.f32.xlu0 %v361
      %v434 = vpop.xlane.xlu0 %433
      %435 = vmax.xlane.f32.xlu0 %v366
      %v436 = vpop.xlane.xlu0 %435
      %437 = vmax.xlane.f32.xlu0 %v371
      %v438 = vpop.xlane.xlu0 %437
      %439 = vmax.xlane.f32.xlu0 %v376
      %v440 = vpop.xlane.xlu0 %439
      %441 = vmax.xlane.f32.xlu0 %v381
      %v442 = vpop.xlane.xlu0 %441
      %443 = vmax.xlane.f32.xlu0 %v386
      %v444 = vpop.xlane.xlu0 %443
      %445 = vmax.xlane.f32.xlu0 %v391
      %v446 = vpop.xlane.xlu0 %445
      %447 = vmax.xlane.f32.xlu0 %v396
      %v448 = vpop.xlane.xlu0 %447
      %449 = vmax.xlane.f32.xlu0 %v401
      %v450 = vpop.xlane.xlu0 %449
      %451 = vmax.xlane.f32.xlu0 %v406
      %v452 = vpop.xlane.xlu0 %451
      %453 = vmax.xlane.f32.xlu0 %v411
      %v454 = vpop.xlane.xlu0 %453
      %455 = vmax.xlane.f32.xlu0 %v416
      %v456 = vpop.xlane.xlu0 %455
      %457 = vmax.xlane.f32.xlu0 %v421
      %v458 = vpop.xlane.xlu0 %457
      %459 = vmax.xlane.f32.xlu0 %v426
      %v460 = vpop.xlane.xlu0 %459
      %v461 = vsub.f32 %v351, %v430
      %v462 = vsub.f32 %v356, %v432
      %v463 = vsub.f32 %v361, %v434
      %v464 = vsub.f32 %v366, %v436
      %v465 = vsub.f32 %v371, %v438
      %v466 = vsub.f32 %v376, %v440
      %v467 = vsub.f32 %v381, %v442
      %v468 = vsub.f32 %v386, %v444
      %v469 = vsub.f32 %v391, %v446
      %v470 = vsub.f32 %v396, %v448
      %v471 = vsub.f32 %v401, %v450
      %v472 = vsub.f32 %v406, %v452
      %v473 = vsub.f32 %v411, %v454
      %v474 = vsub.f32 %v416, %v456
      %v475 = vsub.f32 %v421, %v458
      %v476 = vsub.f32 %v426, %v460
      %v477 = vmul.f32 %v461, 1.442695
      %v478 = vpow.pop %v477
      %v479 = vmul.f32 %v462, 1.442695
      %v480 = vpow.pop %v479
      %v481 = vmul.f32 %v463, 1.442695
      %v482 = vpow.pop %v481
      %v483 = vmul.f32 %v464, 1.442695
      %v484 = vpow.pop %v483
      %v485 = vmul.f32 %v465, 1.442695
      %v486 = vpow.pop %v485
      %v487 = vmul.f32 %v466, 1.442695
      %v488 = vpow.pop %v487
      %v489 = vmul.f32 %v467, 1.442695
      %v490 = vpow.pop %v489
      %v491 = vmul.f32 %v468, 1.442695
      %v492 = vpow.pop %v491
      %v493 = vmul.f32 %v469, 1.442695
      %v494 = vpow.pop %v493
      %v495 = vmul.f32 %v470, 1.442695
      %v496 = vpow.pop %v495
      %v497 = vmul.f32 %v471, 1.442695
      %v498 = vpow.pop %v497
      %v499 = vmul.f32 %v472, 1.442695
      %v500 = vpow.pop %v499
      %v501 = vmul.f32 %v473, 1.442695
      %v502 = vpow.pop %v501
      %v503 = vmul.f32 %v474, 1.442695
      %v504 = vpow.pop %v503
      %v505 = vmul.f32 %v475, 1.442695
      %v506 = vpow.pop %v505
      %v507 = vmul.f32 %v476, 1.442695
      %v508 = vpow.pop %v507
      %509 = vadd.xlane.f32.xlu0 %v478
      %v510 = vpop.xlane.xlu0 %509
      %511 = vadd.xlane.f32.xlu0 %v480
      %v512 = vpop.xlane.xlu0 %511
      %513 = vadd.xlane.f32.xlu0 %v482
      %v514 = vpop.xlane.xlu0 %513
      %515 = vadd.xlane.f32.xlu0 %v484
      %v516 = vpop.xlane.xlu0 %515
      %517 = vadd.xlane.f32.xlu0 %v486
      %v518 = vpop.xlane.xlu0 %517
      %519 = vadd.xlane.f32.xlu0 %v488
      %v520 = vpop.xlane.xlu0 %519
      %521 = vadd.xlane.f32.xlu0 %v490
      %v522 = vpop.xlane.xlu0 %521
      %523 = vadd.xlane.f32.xlu0 %v492
      %v524 = vpop.xlane.xlu0 %523
      %525 = vadd.xlane.f32.xlu0 %v494
      %v526 = vpop.xlane.xlu0 %525
      %527 = vadd.xlane.f32.xlu0 %v496
      %v528 = vpop.xlane.xlu0 %527
      %529 = vadd.xlane.f32.xlu0 %v498
      %v530 = vpop.xlane.xlu0 %529
      %531 = vadd.xlane.f32.xlu0 %v500
      %v532 = vpop.xlane.xlu0 %531
      %533 = vadd.xlane.f32.xlu0 %v502
      %v534 = vpop.xlane.xlu0 %533
      %535 = vadd.xlane.f32.xlu0 %v504
      %v536 = vpop.xlane.xlu0 %535
      %537 = vadd.xlane.f32.xlu0 %v506
      %v538 = vpop.xlane.xlu0 %537
      %539 = vadd.xlane.f32.xlu0 %v508
      %v540 = vpop.xlane.xlu0 %539
      %v541 = vrcp.pop %v510
      %v542 = vrcp.pop %v512
      %v543 = vrcp.pop %v514
      %v544 = vrcp.pop %v516
      %v545 = vrcp.pop %v518
      %v546 = vrcp.pop %v520
      %v547 = vrcp.pop %v522
      %v548 = vrcp.pop %v524
      %v549 = vrcp.pop %v526
      %v550 = vrcp.pop %v528
      %v551 = vrcp.pop %v530
      %v552 = vrcp.pop %v532
      %v553 = vrcp.pop %v534
      %v554 = vrcp.pop %v536
      %v555 = vrcp.pop %v538
      %v556 = vrcp.pop %v540
      %v557 = vmul.f32 %v478, %v541
      %v558 = vmul.f32 %v480, %v542
      %v559 = vmul.f32 %v482, %v543
      %v560 = vmul.f32 %v484, %v544
      %v561 = vmul.f32 %v486, %v545
      %v562 = vmul.f32 %v488, %v546
      %v563 = vmul.f32 %v490, %v547
      %v564 = vmul.f32 %v492, %v548
      %v565 = vmul.f32 %v494, %v549
      %v566 = vmul.f32 %v496, %v550
      %v567 = vmul.f32 %v498, %v551
      %v568 = vmul.f32 %v500, %v552
      %v569 = vmul.f32 %v502, %v553
      %v570 = vmul.f32 %v504, %v554
      %v571 = vmul.f32 %v506, %v555
      %v572 = vmul.f32 %v508, %v556
      %v573 = vld [vmem:[%s2] sm:$0xff]
      %v574 = vld [vmem:[%s2 + $0x8] sm:$0xff]
      %v575 = vld [vmem:[%s2 + $0x10] sm:$0xff]
      %v576 = vld [vmem:[%s2 + $0x18] sm:$0xff]
      %v577 = vld [vmem:[%s2 + $0x20] sm:$0xff]
      %v578 = vld [vmem:[%s2 + $0x28] sm:$0xff]
      %v579 = vld [vmem:[%s2 + $0x30] sm:$0xff]
      %v580 = vld [vmem:[%s2 + $0x38] sm:$0xff]
      %v581 = vld [vmem:[%s2 + $0x40] sm:$0xff]
      %v582 = vld [vmem:[%s2 + $0x48] sm:$0xff]
      %v583 = vld [vmem:[%s2 + $0x50] sm:$0xff]
      %v584 = vld [vmem:[%s2 + $0x58] sm:$0xff]
      %v585 = vld [vmem:[%s2 + $0x60] sm:$0xff]
      %v586 = vld [vmem:[%s2 + $0x68] sm:$0xff]
      %v587 = vld [vmem:[%s2 + $0x70] sm:$0xff]
      %v588 = vld [vmem:[%s2 + $0x78] sm:$0xff]
      %v589 = vadd.f32 %v557, %v573
      %v590 = vadd.f32 %v558, %v574
      %v591 = vadd.f32 %v559, %v575
      %v592 = vadd.f32 %v560, %v576
      %v593 = vadd.f32 %v561, %v577
      %v594 = vadd.f32 %v562, %v578
      %v595 = vadd.f32 %v563, %v579
      %v596 = vadd.f32 %v564, %v580
      %v597 = vadd.f32 %v565, %v581
      %v598 = vadd.f32 %v566, %v582
      %v599 = vadd.f32 %v567, %v583
      %v600 = vadd.f32 %v568, %v584
      %v601 = vadd.f32 %v569, %v585
      %v602 = vadd.f32 %v570, %v586
      %v603 = vadd.f32 %v571, %v587
      %v604 = vadd.f32 %v572, %v588
      %605 = vmatprep.subr.mxu0 0.0
      %606 = vmatpush1.msra.mxu0 %v171
      %607 = vmatprep.subr.mxu0 0.0
      %608 = vmatpush1.msra.mxu0 %v172
      %609 = vmatprep.subr.mxu0 0.0
      %610 = vmatpush1.msra.mxu0 %v173
      %611 = vmatprep.subr.mxu0 0.0
      %612 = vmatpush1.msra.mxu0 %v174
      %613 = vmatprep.subr.mxu0 0.0
      %614 = vmatpush1.msra.mxu0 %v175
      %615 = vmatprep.subr.mxu0 0.0
      %616 = vmatpush1.msra.mxu0 %v176
      %617 = vmatprep.subr.mxu0 0.0
      %618 = vmatpush1.msra.mxu0 %v177
      %619 = vmatprep.subr.mxu0 0.0
      %620 = vmatpush1.msra.mxu0 %v178
      %621 = vmatprep.subr.mxu0 0.0
      %622 = vmatpush1.msra.mxu0 %v179
      %623 = vmatprep.subr.mxu0 0.0
      %624 = vmatpush1.msra.mxu0 %v180
      %625 = vmatprep.subr.mxu0 0.0
      %626 = vmatpush1.msra.mxu0 %v181
      %627 = vmatprep.subr.mxu0 0.0
      %628 = vmatpush1.msra.mxu0 %v182
      %629 = vmatprep.subr.mxu0 0.0
      %630 = vmatpush1.msra.mxu0 %v183
      %631 = vmatprep.subr.mxu0 0.0
      %632 = vmatpush1.msra.mxu0 %v184
      %633 = vmatprep.subr.mxu0 0.0
      %634 = vmatpush1.msra.mxu0 %v185
      %635 = vmatprep.subr.mxu0 0.0
      %636 = vmatpush1.msra.mxu0 %v186
      %637 = vmatprep.subr.mxu0 0.0
      %638 = vmatpush1.msra.mxu0 0.0
      %639 = vmatprep.subr.mxu0 0.0
      %640 = vmatpush1.msra.mxu0 0.0
      %641 = vmatprep.subr.mxu0 0.0
      %642 = vmatpush1.msra.mxu0 0.0
      %643 = vmatprep.subr.mxu0 0.0
      %644 = vmatpush1.msra.mxu0 0.0
      %645 = vmatprep.subr.mxu0 0.0
      %646 = vmatpush1.msra.mxu0 0.0
      %647 = vmatprep.subr.mxu0 0.0
      %648 = vmatpush1.msra.mxu0 0.0
      %649 = vmatprep.subr.mxu0 0.0
      %650 = vmatpush1.msra.mxu0 0.0
      %651 = vmatprep.subr.mxu0 0.0
      %652 = vmatpush1.msra.mxu0 0.0
      %653 = vmatprep.subr.mxu0 0.0
      %654 = vmatpush1.msra.mxu0 0.0
      %655 = vmatprep.subr.mxu0 0.0
      %656 = vmatpush1.msra.mxu0 0.0
      %657 = vmatprep.subr.mxu0 0.0
      %658 = vmatpush1.msra.mxu0 0.0
      %659 = vmatprep.subr.mxu0 0.0
      %660 = vmatpush1.msra.mxu0 0.0
      %661 = vmatprep.subr.mxu0 0.0
      %662 = vmatpush1.msra.mxu0 0.0
      %663 = vmatprep.subr.mxu0 0.0
      %664 = vmatpush1.msra.mxu0 0.0
      %665 = vmatprep.subr.mxu0 0.0
      %666 = vmatpush1.msra.mxu0 0.0
      %667 = vmatprep.subr.mxu0 0.0
      %668 = vmatpush1.msra.mxu0 0.0
      %669 = vmatprep.mubr.f32.mxu0 0.0
      %670 = vmatmul.mubr.f32.gmra.mrb[0].mxu0 %v589
      %v671 = vpop.f32.mrb[0].mxu0
      %v672 = vadd.f32 0.0, %v671
      %v673 = vpop.f32.mrb[0].mxu0
      %674 = vmatprep.mubr.f32.mxu0 0.0
      %675 = vmatmul.mubr.f32.gmra.mrb[0].mxu0 %v590
      %v676 = vpop.f32.mrb[0].mxu0
      %v677 = vadd.f32 0.0, %v676
      %v678 = vpop.f32.mrb[0].mxu0
      %679 = vmatprep.mubr.f32.mxu0 0.0
      %680 = vmatmul.mubr.f32.gmra.mrb[0].mxu0 %v591
      %v681 = vpop.f32.mrb[0].mxu0
      %v682 = vadd.f32 0.0, %v681
      %v683 = vpop.f32.mrb[0].mxu0
      %684 = vmatprep.mubr.f32.mxu0 0.0
      %685 = vmatmul.mubr.f32.gmra.mrb[0].mxu0 %v592
      %v686 = vpop.f32.mrb[0].mxu0
      %v687 = vadd.f32 0.0, %v686
      %v688 = vpop.f32.mrb[0].mxu0
      %689 = vmatprep.mubr.f32.mxu0 0.0
      %690 = vmatmul.mubr.f32.gmra.mrb[0].mxu0 %v593
      %v691 = vpop.f32.mrb[0].mxu0
      %v692 = vadd.f32 0.0, %v691
      %v693 = vpop.f32.mrb[0].mxu0
      %694 = vmatprep.mubr.f32.mxu0 0.0
      %695 = vmatmul.mubr.f32.gmra.mrb[0].mxu0 %v594
      %v696 = vpop.f32.mrb[0].mxu0
      %v697 = vadd.f32 0.0, %v696
      %v698 = vpop.f32.mrb[0].mxu0
      %699 = vmatprep.mubr.f32.mxu0 0.0
      %700 = vmatmul.mubr.f32.gmra.mrb[0].mxu0 %v595
      %v701 = vpop.f32.mrb[0].mxu0
      %v702 = vadd.f32 0.0, %v701
      %v703 = vpop.f32.mrb[0].mxu0
      %704 = vmatprep.mubr.f32.mxu0 0.0
      %705 = vmatmul.mubr.f32.gmra.mrb[0].mxu0 %v596
      %v706 = vpop.f32.mrb[0].mxu0
      %v707 = vadd.f32 0.0, %v706
      %v708 = vpop.f32.mrb[0].mxu0
      %709 = vmatprep.mubr.f32.mxu0 0.0
      %710 = vmatmul.mubr.f32.gmra.mrb[0].mxu0 %v597
      %v711 = vpop.f32.mrb[0].mxu0
      %v712 = vadd.f32 0.0, %v711
      %v713 = vpop.f32.mrb[0].mxu0
      %714 = vmatprep.mubr.f32.mxu0 0.0
      %715 = vmatmul.mubr.f32.gmra.mrb[0].mxu0 %v598
      %v716 = vpop.f32.mrb[0].mxu0
      %v717 = vadd.f32 0.0, %v716
      %v718 = vpop.f32.mrb[0].mxu0
      %719 = vmatprep.mubr.f32.mxu0 0.0
      %720 = vmatmul.mubr.f32.gmra.mrb[0].mxu0 %v599
      %v721 = vpop.f32.mrb[0].mxu0
      %v722 = vadd.f32 0.0, %v721
      %v723 = vpop.f32.mrb[0].mxu0
      %724 = vmatprep.mubr.f32.mxu0 0.0
      %725 = vmatmul.mubr.f32.gmra.mrb[0].mxu0 %v600
      %v726 = vpop.f32.mrb[0].mxu0
      %v727 = vadd.f32 0.0, %v726
      %v728 = vpop.f32.mrb[0].mxu0
      %729 = vmatprep.mubr.f32.mxu0 0.0
      %730 = vmatmul.mubr.f32.gmra.mrb[0].mxu0 %v601
      %v731 = vpop.f32.mrb[0].mxu0
      %v732 = vadd.f32 0.0, %v731
      %v733 = vpop.f32.mrb[0].mxu0
      %734 = vmatprep.mubr.f32.mxu0 0.0
      %735 = vmatmul.mubr.f32.gmra.mrb[0].mxu0 %v602
      %v736 = vpop.f32.mrb[0].mxu0
      %v737 = vadd.f32 0.0, %v736
      %v738 = vpop.f32.mrb[0].mxu0
      %739 = vmatprep.mubr.f32.mxu0 0.0
      %740 = vmatmul.mubr.f32.gmra.mrb[0].mxu0 %v603
      %v741 = vpop.f32.mrb[0].mxu0
      %v742 = vadd.f32 0.0, %v741
      %v743 = vpop.f32.mrb[0].mxu0
      %744 = vmatprep.mubr.f32.mxu0 0.0
      %745 = vmatmul.mubr.f32.gmra.mrb[0].mxu0 %v604
      %v746 = vpop.f32.mrb[0].mxu0
      %v747 = vadd.f32 0.0, %v746
      %v748 = vpop.f32.mrb[0].mxu0
      %749 = vdwg.mxu0
      %750 = vst.msk [vmem:[%s170] sm:$0xff] %vm235, %v672
      %751 = vst.msk [vmem:[%s170 + $0x8] sm:$0xff] %vm235, %v677
      %752 = vst.msk [vmem:[%s170 + $0x10] sm:$0xff] %vm235, %v682
      %753 = vst.msk [vmem:[%s170 + $0x18] sm:$0xff] %vm235, %v687
      %754 = vst.msk [vmem:[%s170 + $0x20] sm:$0xff] %vm235, %v692
      %755 = vst.msk [vmem:[%s170 + $0x28] sm:$0xff] %vm235, %v697
      %756 = vst.msk [vmem:[%s170 + $0x30] sm:$0xff] %vm235, %v702
      %757 = vst.msk [vmem:[%s170 + $0x38] sm:$0xff] %vm235, %v707
      %758 = vst.msk [vmem:[%s170 + $0x40] sm:$0xff] %vm235, %v712
      %759 = vst.msk [vmem:[%s170 + $0x48] sm:$0xff] %vm235, %v717
      %760 = vst.msk [vmem:[%s170 + $0x50] sm:$0xff] %vm235, %v722
      %761 = vst.msk [vmem:[%s170 + $0x58] sm:$0xff] %vm235, %v727
      %762 = vst.msk [vmem:[%s170 + $0x60] sm:$0xff] %vm235, %v732
      %763 = vst.msk [vmem:[%s170 + $0x68] sm:$0xff] %vm235, %v737
      %764 = vst.msk [vmem:[%s170 + $0x70] sm:$0xff] %vm235, %v742
      %765 = vst.msk [vmem:[%s170 + $0x78] sm:$0xff] %vm235, %v747
      %p766 = scmp.lt.s32.totalorder %s14, 1
      %s767 = scalar_select %p766, %s14, 1
      %s768 = smul.addr %s767, 16
      %s769 = smul.addr %s768, 8
      %s770 = scalar_lea.vmem %s3, %s769
      // Predicated region
      $region33: #{tpu_custom_call.1} parent=31 // pred_check
        %p771 = pneg %p100
      $region34: #{tpu_custom_call.1} parent=31 // pred_check_branch
        %773 = sbr.rel (%p771) target = $region36
      $region35: #{tpu_custom_call.1} parent=31 // pred_region
        _
      $region36: #{tpu_custom_call.1} parent=31 // pred_fallthru
        _
    $region32: #{tpu_custom_call.1} parent=5 // pred_fallthru
      _
    %p774 = scmp.le.s32.totalorder 2, %s9
    // Predicated region
    $region37: #{tpu_custom_call.1} parent=5 // pred_check
      %p775 = pneg %p774
    $region38: #{tpu_custom_call.1} parent=5 // pred_check_branch
      %777 = sbr.rel (%p775) target = $region40
    $region39: #{tpu_custom_call.1} parent=5 // pred_region
      %s778 = ssub.s32 %s9, 2
      // Predicated region
      $region41: #{tpu_custom_call.1} parent=39 // pred_check
        %p779 = pneg %p106
      $region42: #{tpu_custom_call.1} parent=39 // pred_check_branch
        %781 = sbr.rel (%p779) target = $region44
      $region43: #{tpu_custom_call.1} parent=39 // pred_region
        %p782 = scmp.lt.s32.totalorder %s15, 1
        %s783 = scalar_select %p782, %s15, 1
        %s784 = smul.addr %s783, 16
        %s785 = smul.addr %s784, 8
        %s786 = scalar_lea.vmem %s3, %s785
      $region44: #{tpu_custom_call.1} parent=39 // pred_fallthru
        _
    $region40: #{tpu_custom_call.1} parent=5 // pred_fallthru
      _
  $region6: #{tpu_custom_call.1} parent=0 // loop_footer
    %s13 = sadd.s32 1, %s9
  $region7: #{tpu_custom_call.1} parent=0 // loop_footer_branch
    %8 = sbr.rel target = $region3
  $region8: #{tpu_custom_call.1} parent=0 // loop_exit
    _

</llo_original>
